<compile_context>
chip_gen: v7x
topology: tpu7x:2x2x1
jax: 0.10.0
libtpu: 0.0.40
codegen_flags: <defaults>
</compile_context>

<pallas_src>
import jax
import jax.numpy as jnp
from jax.experimental import pallas as pl
from jax.experimental.pallas import tpu as pltpu

_LANE = 128              # vreg lane width: output slab last dim
_MAX_TILE_ROWS = 8192    # 8192 x 128 f32 = 4 MiB block (8 MiB double-buffered)
_MIN_BLOCKS = 2          # prefer >= 2 blocks so "parallel" shards across v7x's 2 TCs
_PALLAS_MIN_N = 1 << 18  # below this, XLA's fused broadcast beats a kernel launch
_VMEM_LIMIT_BYTES = 32 << 20  # covers v5e's 16 MiB scoped default; safe on all gens


def _splat_kernel(param_ref, out_ref):
    # param_ref: (1,) f32 scalar in SMEM; out_ref: (tile_rows, 128) f32 in VMEM.
    # Pure fill: one broadcast + unmasked lane-dense stores; the HBM writeback
    # DMA is the true bottleneck for an output-only kernel.
    out_ref[...] = jnp.full(out_ref.shape, param_ref[0], dtype=out_ref.dtype)


def _round_up8(x: int) -> int:
    return ((x + 7) // 8) * 8


def _pallas_fill(param: jax.Array, n: int) -> jax.Array:
    """Write `param` into every element of an (n, 1) f32 array via Pallas."""
    if n == 0:
        return jnp.zeros((0, 1), dtype=jnp.float32)

    # Rows of 128 lanes needed to hold n values (exact, no tile-padded slab).
    rows_needed = pl.cdiv(n, _LANE)

    # Largest tile that (a) stays <= _MAX_TILE_ROWS and (b) still yields >= 2
    # blocks when there is enough work, so both TensorCores on v7x get a share.
    rows_per_core = _round_up8(pl.cdiv(rows_needed, _MIN_BLOCKS))
    tile_rows = max(8, min(_MAX_TILE_ROWS, rows_per_core))
    num_blocks = pl.cdiv(rows_needed, tile_rows)

    param_smem = jnp.asarray(param, jnp.float32).reshape((1,))

    slab = pl.pallas_call(
        _splat_kernel,
        out_shape=jax.ShapeDtypeStruct((rows_needed, _LANE), jnp.float32),
        grid=(num_blocks,),
        in_specs=[pl.BlockSpec(memory_space=pltpu.SMEM)],
        out_specs=pl.BlockSpec((tile_rows, _LANE), lambda i: (i, 0)),
        compiler_params=pltpu.CompilerParams(
            dimension_semantics=("parallel",),
            vmem_limit_bytes=_VMEM_LIMIT_BYTES),
    )(param_smem)

    # Layout plumbing outside the kernel.  When n % 128 == 0 this is a pure
    # reshape (no data movement); otherwise only a <=127-element trim remains.
    flat = slab.reshape(-1)
    if flat.shape[0] != n:
        flat = flat[:n]
    return flat.reshape(n, 1)


def _simple_nn_impl(param: jax.Array, sources: jax.Array, targets: jax.Array) -> jax.Array:
    del targets  # unused, mirrors the PyTorch module
    n = sources.shape[0]
    if n >= _PALLAS_MIN_N:
        return _pallas_fill(param, n)
    # Small/medium batches: XLA's fused broadcast already hits the write
    # roofline with no custom-call launch overhead.
    return jnp.full((n, 1), jnp.asarray(param, jnp.float32), dtype=jnp.float32)


@jax.custom_vjp
def simple_nn_forward(param: jax.Array, sources: jax.Array, targets: jax.Array) -> jax.Array:
    """Pallas-backed equivalent of SimpleNN.forward(sources, targets)."""
    return _simple_nn_impl(param, sources, targets)


def _simple_nn_fwd(param, sources, targets):
    return _simple_nn_impl(param, sources, targets), (sources, targets)


def _simple_nn_bwd(res, ct):
    sources, targets = res
    # d/d_param of (param * ones) contracted with cotangent = sum(ct);
    # sources/targets do not influence the output values.
    return (jnp.sum(ct).astype(jnp.float32),
            jnp.zeros_like(sources),
            jnp.zeros_like(targets))


simple_nn_forward.defvjp(_simple_nn_fwd, _simple_nn_bwd)


if __name__ == "__main__":
    key = jax.random.PRNGKey(0)
    k_src, k_tgt = jax.random.split(key)

    # Small deterministic inputs; only sources.shape[0] matters for the output.
    batch, feat = 2, 8
    sources = jax.random.normal(k_src, (batch, feat), dtype=jnp.float32)
    targets = jax.random.normal(k_tgt, (batch, feat), dtype=jnp.float32)

    # Deterministic parameter init, matching nn.Parameter(torch.tensor(1.0)).
    param = jnp.array(1.0, dtype=jnp.float32)

    # 1) Run the Pallas kernel itself on the tiny batch (adaptive 8x128 tile,
    #    partial block + trim path).
    out_pallas = jax.block_until_ready(_pallas_fill(param, batch))
    ref_small = jnp.full((batch, 1), 1.0, dtype=jnp.float32)
    assert out_pallas.shape == (batch, 1), out_pallas.shape
    assert jnp.allclose(out_pallas, ref_small), (out_pallas, ref_small)

    # 2) Pallas kernel with N % 128 == 0: pure-view plumbing, single block.
    n_view = 4096
    out_view = jax.block_until_ready(_pallas_fill(param, n_view))
    assert out_view.shape == (n_view, 1), out_view.shape
    assert jnp.allclose(out_view, jnp.full((n_view, 1), 1.0, jnp.float32))

    # 3) Pallas kernel with a multi-block grid (2 blocks, partial last block),
    #    exercising the "parallel" sharding path.
    n_big = 1_050_000
    out_big = jax.block_until_ready(_pallas_fill(param, n_big))
    assert out_big.shape == (n_big, 1), out_big.shape
    assert jnp.allclose(out_big, jnp.full((n_big, 1), 1.0, jnp.float32))

    # 4) Module-level forward at the spec's tiny batch (dispatches to jnp.full).
    out = jax.block_until_ready(simple_nn_forward(param, sources, targets))
    assert out.shape == (batch, 1), out.shape
    assert jnp.allclose(out, ref_small), (out, ref_small)

    # 5) Gradient flow (the point of the original test): d/d_param sum(out) = N.
    g = jax.grad(lambda p: simple_nn_forward(p, sources, targets).sum())(param)
    g = jax.block_until_ready(g)
    assert jnp.allclose(g, float(batch)), g

    print("KERNEL_OK")
</pallas_src>

<mosaic_0001>
module attributes {stable_mosaic.version = 11 : i64} {
  func.func @_splat_kernel(%arg0: i32, %arg1: memref<1xf32, #tpu.memory_space<smem>>, %arg2: memref<8x128xf32, #tpu.memory_space<vmem>>) attributes {dimension_semantics = [#tpu.dimension_semantics<parallel>], iteration_bounds = array<i64: 1>, scalar_prefetch = 0 : i64, scratch_operands = 0 : i64, tpu.core_type = #tpu.core_type<tc>, window_params = [{transform_indices = @transform_0, window_bounds = array<i64: 1>}, {transform_indices = @transform_1, window_bounds = array<i64: 8, 128>}]} {
    %c0 = arith.constant 0 : index
    %0 = memref.load %arg1[%c0] : memref<1xf32, #tpu.memory_space<smem>>
    %1 = vector.broadcast %0 : f32 to vector<8x128xf32>
    %c0_0 = arith.constant 0 : index
    %c0_1 = arith.constant 0 : index
    %2 = vector.load %arg2[%c0_0, %c0_1] : memref<8x128xf32, #tpu.memory_space<vmem>>, vector<8x128xf32>
    tpu.vector_store %arg2[%c0_0, %c0_1], %1 {strides = array<i32>} : memref<8x128xf32, #tpu.memory_space<vmem>>, vector<8x128xf32>,
    return
  }
  func.func @transform_0(%arg0: i32) -> i32 {
    %c0_i32 = arith.constant 0 : i32
    %c0_i32_0 = arith.constant 0 : i32
    return %c0_i32 : i32
  }
  func.func @transform_1(%arg0: i32) -> (i32, i32) {
    %c0_i32 = arith.constant 0 : i32
    %c0_i32_0 = arith.constant 0 : i32
    return %arg0, %c0_i32 : i32, i32
  }
}

</mosaic_0001>

<llo_original>
// kernel: tpu_custom_call.1
$region0: #{tpu_custom_call.1}
  #allocation0 [shape = 'u32[]', space=smem, size = 0x4, offset = 0x4, fixed_abs, tag = 'smem constant byte address 0x4 - core index']
  #allocation1 [shape = 'u32[144,128]{1,0:T(1,128)}', space=vmem, size = 0x12000, scoped, tag = 'internal scratch']
  #allocation2 [shape = 'f32[1]{0:T(128)S(6)}', space=smem, size = 0x200, scoped, tag = 'scoped memory for tpu_custom_call.1']
  %s0 = inlined_call_operand.<no memory space> [shape: f32[1], index: 0, kind: input, shape index: {}]
  %s1 = inlined_call_operand.hbm [shape: f32[1,128], index: 1, kind: output, shape index: {}]
  %s2 = sld [smem:[#allocation0]]
  $region14: #{tpu_custom_call.1} parent=0
    _
  %s4 = ssub.s32 1, %s2
  %s5 = scalar_select 0, %s4, %s2
  %6 = sst [smem:[#allocation2]] %s0
  $region1: #{tpu_custom_call.1} parent=0
    #allocation3 [shape = 'u8[4096]{0}', space=vmem, size = 0x1000, scoped, tag = 'output window, operand 0, single buffered']
    #allocation4 [shape = 's32[1]{0}', space=sflag, size = 0x4, scoped, tag = 'scoped memory for tpu_custom_call.1']
    %7 = vsyncpa [#allocation4], 0
    // Predicated region
    $region2: #{tpu_custom_call.1} parent=1 // pred_check
      _
    $region3: #{tpu_custom_call.1} parent=1 // pred_check_branch
      %9 = sbr.rel (0) target = $region5
    $region4: #{tpu_custom_call.1} parent=1 // pred_region
      _
    $region5: #{tpu_custom_call.1} parent=1 // pred_fallthru
      _
    %s10 = sld [smem:[#allocation2]]
    %v11 = vstv %s10
    %12 = vst [vmem:[#allocation3] sm:$0xff] %v11
    // Predicated region
    $region6: #{tpu_custom_call.1} parent=1 // pred_check
      _
    $region7: #{tpu_custom_call.1} parent=1 // pred_check_branch
      %14 = sbr.rel (0) target = $region9
    $region8: #{tpu_custom_call.1} parent=1 // pred_region
      %s16 = ssub.s32 128, 16
      %17 = vsyncadd [#allocation4], %s16
      %s18 = sshll.u32 [#allocation3], 4
      %s19 = int_to_ptr.vmem [resolvable:$true] %s18
      %24 = dma.vmem_to_hbm [thread:$0]  %s19, 16, %s1, [#allocation4], 16, 16, 1
    $region9: #{tpu_custom_call.1} parent=1 // pred_fallthru
      _
    // Predicated region
    $region10: #{tpu_custom_call.1} parent=1 // pred_check
      _
    $region11: #{tpu_custom_call.1} parent=1 // pred_check_branch
      %26 = sbr.rel (0) target = $region13
    $region12: #{tpu_custom_call.1} parent=1 // pred_region
      %27 = dma.done [#allocation4], 128
    $region13: #{tpu_custom_call.1} parent=1 // pred_fallthru
      _
    %28 = vsyncpa [#allocation4], 1

</llo_original>
